<compile_context>
chip_gen: v7x
topology: tpu7x:2x2x1
jax: 0.10.0
libtpu: 0.0.40
codegen_flags: <defaults>
</compile_context>

<pallas_src>
import functools

import jax
import jax.numpy as jnp
from jax.experimental import pallas as pl
from jax.experimental.pallas import tpu as pltpu


def _focal_loss_kernel(logits_ref, targets_ref, alpha_ref, out_ref, *,
                       gamma, n_valid, use_mxu, has_alpha):
    logits = logits_ref[...].astype(jnp.float32)       # (TN, C)
    targets = targets_ref[...]                          # (TN, 1) int32
    alpha = alpha_ref[...].astype(jnp.float32)          # (1, C)

    tn, c = logits.shape

    # Numerically stable log-softmax per row.
    row_max = jnp.max(logits, axis=-1, keepdims=True)                   # (TN, 1)
    shifted = logits - row_max                                          # (TN, C)
    lse = jnp.log(jnp.sum(jnp.exp(shifted), axis=-1, keepdims=True))    # (TN, 1)
    log_probs = shifted - lse                                           # (TN, C)

    # One-hot gather of the target class (TPU needs >=2D iota).
    # TODO(synk): out-of-range / negative targets silently give 0 loss here
    # (one-hot never matches) instead of erroring like torch's gather.
    class_ids = jax.lax.broadcasted_iota(jnp.int32, (tn, c), 1)         # (TN, C)
    one_hot = class_ids == targets                                      # (TN, C)

    # ce = -alpha[target] * log_p[target]
    if use_mxu:
        # bf16/f16 inputs on v6e/v7x: the kernel tips XLU-bound; do the masked
        # class reduction on the MXU instead (matvec over the class axis).
        masked = jnp.where(one_hot, log_probs, 0.0)                     # (TN, C)
        ce = -jax.lax.dot_general(
            masked, alpha,
            dimension_numbers=(((1,), (1,)), ((), ())),
            preferred_element_type=jnp.float32)                         # (TN, 1)
    else:
        weighted = log_probs * alpha if has_alpha else log_probs
        ce = -jnp.sum(jnp.where(one_hot, weighted, 0.0),
                      axis=-1, keepdims=True)                           # (TN, 1)

    pt = jnp.exp(-ce)                                                   # (TN, 1)
    one_minus_pt = 1.0 - pt

    if float(gamma).is_integer():
        ig = int(gamma)
        if ig == 0:
            focal = jnp.ones_like(one_minus_pt)
        elif ig == 1:
            focal = one_minus_pt
        elif ig == 2:
            focal = jnp.square(one_minus_pt)          # 1 VPU mul, no log/exp
        else:
            focal = jax.lax.integer_pow(one_minus_pt, ig)
    else:
        focal = one_minus_pt ** jnp.float32(gamma)    # non-integer gamma only

    loss = focal * ce                                                   # (TN, 1)

    # Ragged-tail mask: rows past the true batch contribute exactly 0. Use a
    # select (not a multiply) so NaN/garbage in the tail rows can't propagate.
    row_ids = pl.program_id(0) * tn + jax.lax.broadcasted_iota(
        jnp.int32, (tn, 1), 0)
    loss = jnp.where(row_ids < n_valid, loss, 0.0)

    tile_sum = jnp.sum(loss)                                            # scalar

    # Lane-dense (1, 8, 128) output block: partial sum at [0, 0, 0], zeros
    # elsewhere. The wrapper sums the whole output.
    sub_ids = jax.lax.broadcasted_iota(jnp.int32, (1, 8, 128), 1)
    lane_ids = jax.lax.broadcasted_iota(jnp.int32, (1, 8, 128), 2)
    out_ref[...] = jnp.where((sub_ids == 0) & (lane_ids == 0), tile_sum, 0.0)


def _choose_tile_rows(n, c, in_itemsize):
    """Rows per logits tile.

    VMEM accounting (per row): 2 double-buffered input tiles (input dtype)
    plus ~5 live (TN, C) f32 temporaries inside the kernel (f32 logits,
    shifted, exp, log_probs, masked product). A ~20 MiB working-set budget
    stays comfortably under v7x's 64 MiB VMEM (48 MiB scoped limit) while
    letting small-C cases use very tall tiles (amortizes per-step overhead).
    """
    per_row_bytes = c * (2 * in_itemsize + 5 * 4) + 8
    budget = 20 * 1024 * 1024
    rows = max(8, min(budget // per_row_bytes, 32768))

    sub = 16 if in_itemsize == 2 else 8          # bf16/f16 sublane packing
    n_round = -(-n // sub) * sub
    rows = min(rows, n_round)
    # Prefer >= 2 tiles so v7x's two TensorCores both get work on the
    # "parallel" grid axis (harmless extra step on single-TC v5e/v6e).
    if n_round >= 2 * sub:
        half = -(-((n_round + 1) // 2) // sub) * sub
        rows = min(rows, half)
    rows = max(sub, (rows // sub) * sub)
    return int(rows)


def focal_loss(logits, targets, alpha=None, gamma=2.0, reduction="mean"):
    """Pallas TPU implementation of FocalLoss.forward.

    logits:  (N, C) float (f32 or bf16/f16 — cast to f32 inside the kernel)
    targets: (N,)   int class indices
    alpha:   optional (C,) per-class weights (PyTorch cross_entropy `weight`)
    """
    n, c = logits.shape
    has_alpha = alpha is not None
    if alpha is None:
        alpha = jnp.ones((c,), dtype=jnp.float32)
    alpha_2d = jnp.asarray(alpha, jnp.float32).reshape(1, c)
    targets_2d = targets.astype(jnp.int32).reshape(n, 1)

    itemsize = jnp.dtype(logits.dtype).itemsize
    tn = _choose_tile_rows(n, c, itemsize)
    num_tiles = pl.cdiv(n, tn)
    use_mxu = itemsize == 2   # bf16/f16: offload masked reduction to the MXU

    kernel = functools.partial(_focal_loss_kernel, gamma=float(gamma),
                               n_valid=n, use_mxu=use_mxu, has_alpha=has_alpha)

    partials = pl.pallas_call(
        kernel,
        out_shape=jax.ShapeDtypeStruct((num_tiles, 8, 128), jnp.float32),
        grid=(num_tiles,),
        in_specs=[
            pl.BlockSpec((tn, c), lambda i: (i, 0)),   # logits tile (ragged tail OK)
            pl.BlockSpec((tn, 1), lambda i: (i, 0)),   # targets tile
            pl.BlockSpec((1, c), lambda i: (0, 0)),    # alpha (shared)
        ],
        out_specs=pl.BlockSpec((1, 8, 128), lambda i: (i, 0, 0)),
        compiler_params=pltpu.CompilerParams(
            dimension_semantics=("parallel",),          # no serial accumulator
            vmem_limit_bytes=48 * 1024 * 1024,          # safe on v7x (64 MiB phys)
        ),
    )(logits, targets_2d, alpha_2d)

    total = jnp.sum(partials)            # only [i, 0, 0] entries are non-zero
    if reduction == "mean":
        return total / jnp.float32(n)    # divide by the true (un-padded) N
    return total                         # 'sum'


def _focal_loss_ref(logits, targets, alpha=None, gamma=2.0, reduction="mean"):
    """Pure-JAX reference mirroring the PyTorch module."""
    logits = logits.astype(jnp.float32)
    n, c = logits.shape
    if alpha is None:
        alpha = jnp.ones((c,), dtype=jnp.float32)
    alpha = jnp.asarray(alpha, jnp.float32)
    log_probs = jax.nn.log_softmax(logits, axis=-1)
    log_p_t = log_probs[jnp.arange(n), targets]
    alpha_t = alpha[targets]
    ce = -alpha_t * log_p_t
    pt = jnp.exp(-ce)
    loss = (1.0 - pt) ** gamma * ce
    return loss.mean() if reduction == "mean" else loss.sum()


if __name__ == "__main__":
    key = jax.random.PRNGKey(0)
    k1, k2, k3, k4, k5, k6, k7, k8 = jax.random.split(key, 8)

    # Case 1: small aligned batch (8 samples, 16 classes), alpha, mean.
    N1, C1 = 8, 16
    logits1 = jax.random.normal(k1, (N1, C1), dtype=jnp.float32) * 2.0
    targets1 = jax.random.randint(k2, (N1,), 0, C1, dtype=jnp.int32)
    alpha1 = jax.random.uniform(k3, (C1,), dtype=jnp.float32, minval=0.5, maxval=1.5)

    out1 = jax.block_until_ready(focal_loss(logits1, targets1, alpha=alpha1,
                                            gamma=2.0, reduction="mean"))
    ref1 = _focal_loss_ref(logits1, targets1, alpha1, gamma=2.0, reduction="mean")
    assert jnp.allclose(out1, ref1, rtol=1e-5, atol=1e-5), (out1, ref1)

    # Case 2: un-aligned batch (ragged tail masking, 2 tiles), no alpha, sum.
    N2, C2 = 37, 7
    logits2 = jax.random.normal(k4, (N2, C2), dtype=jnp.float32) * 3.0
    targets2 = jax.random.randint(k5, (N2,), 0, C2, dtype=jnp.int32)

    out2 = jax.block_until_ready(focal_loss(logits2, targets2, alpha=None,
                                            gamma=2.0, reduction="sum"))
    ref2 = _focal_loss_ref(logits2, targets2, None, gamma=2.0, reduction="sum")
    assert jnp.allclose(out2, ref2, rtol=1e-5, atol=1e-5), (out2, ref2)

    # Case 3: bf16 logits (exercises the MXU masked-reduction path + 16-row
    # sublane rounding + ragged tail), alpha, mean.
    N3, C3 = 48, 32
    logits3 = (jax.random.normal(k6, (N3, C3), dtype=jnp.float32) * 2.0
               ).astype(jnp.bfloat16)
    targets3 = jax.random.randint(k7, (N3,), 0, C3, dtype=jnp.int32)
    alpha3 = jax.random.uniform(k8, (C3,), dtype=jnp.float32, minval=0.5, maxval=1.5)

    out3 = jax.block_until_ready(focal_loss(logits3, targets3, alpha=alpha3,
                                            gamma=2.0, reduction="mean"))
    ref3 = _focal_loss_ref(logits3, targets3, alpha3, gamma=2.0, reduction="mean")
    assert jnp.allclose(out3, ref3, rtol=2e-2, atol=1e-4), (out3, ref3)

    print("KERNEL_OK")
</pallas_src>

<mosaic_0001>
module attributes {stable_mosaic.version = 11 : i64} {
  func.func @_focal_loss_kernel(%arg0: i32, %arg1: memref<8x16xf32, #tpu.memory_space<vmem>>, %arg2: memref<8x1xi32, #tpu.memory_space<vmem>>, %arg3: memref<1x16xf32, #tpu.memory_space<vmem>>, %arg4: memref<1x8x128xf32, #tpu.memory_space<vmem>>) attributes {dimension_semantics = [#tpu.dimension_semantics<parallel>], iteration_bounds = array<i64: 1>, scalar_prefetch = 0 : i64, scratch_operands = 0 : i64, tpu.core_type = #tpu.core_type<tc>, window_params = [{transform_indices = @transform_0, window_bounds = array<i64: 8, 16>}, {transform_indices = @transform_1, window_bounds = array<i64: 8, 1>}, {pipeline_mode = #tpu.pipeline_mode<synchronous>, transform_indices = @transform_2, window_bounds = array<i64: 1, 16>}, {transform_indices = @transform_3, window_bounds = array<i64: 1, 8, 128>}]} {
    %c0 = arith.constant 0 : index
    %c0_0 = arith.constant 0 : index
    %0 = vector.load %arg1[%c0, %c0_0] : memref<8x16xf32, #tpu.memory_space<vmem>>, vector<8x16xf32>
    %c0_1 = arith.constant 0 : index
    %c0_2 = arith.constant 0 : index
    %1 = vector.load %arg2[%c0_1, %c0_2] : memref<8x1xi32, #tpu.memory_space<vmem>>, vector<8x1xi32>
    %c0_3 = arith.constant 0 : index
    %c0_4 = arith.constant 0 : index
    %2 = vector.load %arg3[%c0_3, %c0_4] : memref<1x16xf32, #tpu.memory_space<vmem>>, vector<1x16xf32>
    %cst = arith.constant dense<0xFF800000> : vector<8xf32>
    %3 = vector.multi_reduction <maximumf>, %0, %cst [1] : vector<8x16xf32> to vector<8xf32>
    %4 = vector.shape_cast %3 : vector<8xf32> to vector<8x1xf32>
    %5 = vector.broadcast %4 : vector<8x1xf32> to vector<8x16xf32>
    %6 = arith.subf %0, %5 : vector<8x16xf32>
    %7 = math.exp %6 : vector<8x16xf32>
    %cst_5 = arith.constant dense<0.000000e+00> : vector<8xf32>
    %8 = vector.multi_reduction <add>, %7, %cst_5 [1] : vector<8x16xf32> to vector<8xf32>
    %9 = vector.shape_cast %8 : vector<8xf32> to vector<8x1xf32>
    %10 = math.log %9 : vector<8x1xf32>
    %11 = vector.broadcast %10 : vector<8x1xf32> to vector<8x16xf32>
    %12 = arith.subf %6, %11 : vector<8x16xf32>
    %13 = tpu.iota {dimensions = array<i32: 1>} : vector<8x16xi32>
    %14 = vector.broadcast %1 : vector<8x1xi32> to vector<8x16xi32>
    %15 = arith.cmpi eq, %13, %14 : vector<8x16xi32>
    %16 = vector.broadcast %2 : vector<1x16xf32> to vector<8x16xf32>
    %17 = arith.mulf %12, %16 : vector<8x16xf32>
    %cst_6 = arith.constant 0.000000e+00 : f32
    %18 = vector.broadcast %cst_6 : f32 to vector<8x16xf32>
    %19 = arith.select %15, %17, %18 : vector<8x16xi1>, vector<8x16xf32>
    %cst_7 = arith.constant dense<0.000000e+00> : vector<8xf32>
    %20 = vector.multi_reduction <add>, %19, %cst_7 [1] : vector<8x16xf32> to vector<8xf32>
    %21 = vector.shape_cast %20 : vector<8xf32> to vector<8x1xf32>
    %cst_8 = arith.constant 0.000000e+00 : f32
    %22 = vector.broadcast %cst_8 : f32 to vector<8x1xf32>
    %23 = arith.subf %22, %21 : vector<8x1xf32>
    %cst_9 = arith.constant 0.000000e+00 : f32
    %24 = vector.broadcast %cst_9 : f32 to vector<8x1xf32>
    %25 = arith.subf %24, %23 : vector<8x1xf32>
    %26 = math.exp %25 : vector<8x1xf32>
    %cst_10 = arith.constant 1.000000e+00 : f32
    %27 = vector.broadcast %cst_10 : f32 to vector<8x1xf32>
    %28 = arith.subf %27, %26 : vector<8x1xf32>
    %29 = arith.mulf %28, %28 : vector<8x1xf32>
    %30 = arith.mulf %29, %23 : vector<8x1xf32>
    %c8_i32 = arith.constant 8 : i32
    %31 = arith.muli %arg0, %c8_i32 : i32
    %32 = tpu.iota {dimensions = array<i32: 0>} : vector<8x1xi32>
    %33 = vector.broadcast %31 : i32 to vector<8x1xi32>
    %34 = arith.addi %33, %32 : vector<8x1xi32>
    %c8_i32_11 = arith.constant 8 : i32
    %35 = vector.broadcast %c8_i32_11 : i32 to vector<8x1xi32>
    %36 = arith.cmpi slt, %34, %35 : vector<8x1xi32>
    %cst_12 = arith.constant 0.000000e+00 : f32
    %37 = vector.broadcast %cst_12 : f32 to vector<8x1xf32>
    %38 = arith.select %36, %30, %37 : vector<8x1xi1>, vector<8x1xf32>
    %39 = vector.shape_cast %38 : vector<8x1xf32> to vector<1x8x1xf32>
    %cst_13 = arith.constant dense<0.000000e+00> : vector<1xf32>
    %40 = vector.multi_reduction <add>, %39, %cst_13 [1, 2] : vector<1x8x1xf32> to vector<1xf32>
    %41 = vector.shape_cast %40 : vector<1xf32> to vector<1x1x1xf32>
    %42 = vector.extract %41[0, 0, 0] : f32 from vector<1x1x1xf32>
    %43 = tpu.iota {dimensions = array<i32: 1>} : vector<1x8x128xi32>
    %44 = tpu.iota {dimensions = array<i32: 2>} : vector<1x8x128xi32>
    %c0_i32 = arith.constant 0 : i32
    %45 = vector.broadcast %c0_i32 : i32 to vector<1x8x128xi32>
    %46 = arith.cmpi eq, %43, %45 : vector<1x8x128xi32>
    %c0_i32_14 = arith.constant 0 : i32
    %47 = vector.broadcast %c0_i32_14 : i32 to vector<1x8x128xi32>
    %48 = arith.cmpi eq, %44, %47 : vector<1x8x128xi32>
    %49 = arith.andi %46, %48 : vector<1x8x128xi1>
    %cst_15 = arith.constant 0.000000e+00 : f32
    %50 = vector.broadcast %42 : f32 to vector<1x8x128xf32>
    %51 = vector.broadcast %cst_15 : f32 to vector<1x8x128xf32>
    %52 = arith.select %49, %50, %51 : vector<1x8x128xi1>, vector<1x8x128xf32>
    %c0_16 = arith.constant 0 : index
    %c0_17 = arith.constant 0 : index
    %c0_18 = arith.constant 0 : index
    %53 = vector.load %arg4[%c0_16, %c0_17, %c0_18] : memref<1x8x128xf32, #tpu.memory_space<vmem>>, vector<1x8x128xf32>
    tpu.vector_store %arg4[%c0_16, %c0_17, %c0_18], %52 {strides = array<i32>} : memref<1x8x128xf32, #tpu.memory_space<vmem>>, vector<1x8x128xf32>,
    return
  }
  func.func @transform_0(%arg0: i32) -> (i32, i32) {
    %c0_i32 = arith.constant 0 : i32
    %c0_i32_0 = arith.constant 0 : i32
    return %arg0, %c0_i32 : i32, i32
  }
  func.func @transform_1(%arg0: i32) -> (i32, i32) {
    %c0_i32 = arith.constant 0 : i32
    %c0_i32_0 = arith.constant 0 : i32
    return %arg0, %c0_i32 : i32, i32
  }
  func.func @transform_2(%arg0: i32) -> (i32, i32) {
    %c0_i32 = arith.constant 0 : i32
    %c0_i32_0 = arith.constant 0 : i32
    %c0_i32_1 = arith.constant 0 : i32
    return %c0_i32, %c0_i32_0 : i32, i32
  }
  func.func @transform_3(%arg0: i32) -> (i32, i32, i32) {
    %c0_i32 = arith.constant 0 : i32
    %c0_i32_0 = arith.constant 0 : i32
    %c0_i32_1 = arith.constant 0 : i32
    return %arg0, %c0_i32, %c0_i32_0 : i32, i32, i32
  }
}

</mosaic_0001>

<llo_original>
// kernel: tpu_custom_call.1
$region0: #{tpu_custom_call.1}
  #allocation0 [shape = 'u32[]', space=smem, size = 0x4, offset = 0x4, fixed_abs, tag = 'smem constant byte address 0x4 - core index']
  #allocation1 [shape = 'u32[144,128]{1,0:T(1,128)}', space=vmem, size = 0x12000, scoped, tag = 'internal scratch']
  %s0 = inlined_call_operand.vmem [shape: f32[8,16], index: 0, kind: input, shape index: {}]
  %s1 = inlined_call_operand.vmem [shape: s32[8,1], index: 1, kind: input, shape index: {}]
  %s2 = inlined_call_operand.vmem [shape: f32[1,16], index: 2, kind: input, shape index: {}]
  %s3 = inlined_call_operand.hbm [shape: f32[1,8,128], index: 3, kind: output, shape index: {}]
  %s4 = sld [smem:[#allocation0]]
  $region22: #{tpu_custom_call.1} parent=0
    _
  %s6 = ssub.s32 1, %s4
  %s7 = scalar_select 0, %s6, %s4
  $region1: #{tpu_custom_call.1} parent=0
    #allocation2 [shape = 'u8[4096]{0}', space=vmem, size = 0x1000, scoped, tag = 'output window, operand 0, single buffered']
    #allocation3 [shape = 's32[1]{0}', space=sflag, size = 0x4, scoped, tag = 'scoped memory for tpu_custom_call.1']
    %8 = vsyncpa [#allocation3], 0
    // Predicated region
    $region2: #{tpu_custom_call.1} parent=1 // pred_check
      _
    $region3: #{tpu_custom_call.1} parent=1 // pred_check_branch
      %10 = sbr.rel (0) target = $region5
    $region4: #{tpu_custom_call.1} parent=1 // pred_region
      _
    $region5: #{tpu_custom_call.1} parent=1 // pred_fallthru
      _
    // Predicated region
    $region6: #{tpu_custom_call.1} parent=1 // pred_check
      _
    $region7: #{tpu_custom_call.1} parent=1 // pred_check_branch
      %12 = sbr.rel (0) target = $region9
    $region8: #{tpu_custom_call.1} parent=1 // pred_region
      _
    $region9: #{tpu_custom_call.1} parent=1 // pred_fallthru
      _
    // Predicated region
    $region10: #{tpu_custom_call.1} parent=1 // pred_check
      _
    $region11: #{tpu_custom_call.1} parent=1 // pred_check_branch
      %14 = sbr.rel (0) target = $region13
    $region12: #{tpu_custom_call.1} parent=1 // pred_region
      _
    $region13: #{tpu_custom_call.1} parent=1 // pred_fallthru
      _
    %v15 = vld [vmem:[%s0] sm:$0xff]
    %v16 = vld [vmem:[%s1] sm:$0xff]
    %v17 = vld [vmem:[%s2] sm:$0x1]
    %vm18 = vcmask 130048
    %v19 = vsel %vm18, %v15, -inf
    %20 = vmax.xlane.f32.xlu0 %v19
    %v21 = vpop.xlane.xlu0 %20
    %v22 = vsub.f32 %v15, %v21
    %v23 = vmul.f32 %v22, 1.442695
    %v24 = vpow.pop %v23
    %v25 = vsel %vm18, %v24, 0.0
    %26 = vadd.xlane.f32.xlu0 %v25
    %v27 = vpop.xlane.xlu0 %26
    %v28 = vlog2.pop %v27
    %v29 = vmul.f32 %v28, 0.6931472
    %v30 = vsub.f32 %v22, %v29
    %v31 = vlaneseq
    %v32 = vand.u32 %v31, 127
    %33 = vset.pattern.permute.xlu0 0
    %34 = vperm.xlu0 %33, %v16
    %v35 = vpop.permute.xlu0 %34
    %vm36 = vcmp.eq.s32.totalorder %v32, %v35
    %v38 = vlaneseq
    %v39 = vshrl.u32 %v38, 7
    %v40 = vsub.s32 0, %v39
    %v41 = vrot.slane %v17, %v40
    %v43 = vmul.f32 %v30, %v41
    %v44 = vsel %vm36, %v43, 0.0
    %v45 = vsel %vm18, %v44, 0.0
    %46 = vadd.xlane.f32.xlu0 %v45
    %v47 = vpop.xlane.xlu0 %46
    %v48 = vsub.f32 0.0, %v47
    %v49 = vsub.f32 0.0, %v48
    %v50 = vmul.f32 %v49, 1.442695
    %v51 = vpow.pop %v50
    %v52 = vsub.f32 1.0, %v51
    %v53 = vmul.f32 %v52, %v52
    %v54 = vmul.f32 %v53, %v48
    %s55 = smul.u32 0, 8
    %v56 = vlaneseq
    %v57 = vshrl.u32 %v56, 7
    %v58 = vstv %s55
    %v59 = vadd.s32 %v58, %v57
    %vm60 = vcmp.lt.s32.totalorder %v59, 8
    %v61 = vsel %vm60, %v54, 0.0
    %vm62 = vcmask 7168
    %v63 = vsel %vm62, %v61, 0.0
    %64 = vadd.xlane.f32.xlu0 %v63
    %v65 = vpop.xlane.xlu0 %64
    %v66 = vrot.slane %v65, 4
    %v67 = vadd.f32 %v65, %v66
    %v68 = vrot.slane %v67, 2
    %v69 = vadd.f32 %v67, %v68
    %v70 = vrot.slane %v69, 1
    %v71 = vadd.f32 %v69, %v70
    %s72 = vtos %v71
    %vm73 = vcmp.eq.s32.totalorder %v57, 0
    %vm74 = vcmp.eq.s32.totalorder %v32, 0
    %vm75 = vmand %vm73, %vm74
    %v76 = vstv %s72
    %v77 = vsel %vm75, %v76, 0.0
    %78 = vst [vmem:[#allocation2] sm:$0xff] %v77
    // Predicated region
    $region14: #{tpu_custom_call.1} parent=1 // pred_check
      _
    $region15: #{tpu_custom_call.1} parent=1 // pred_check_branch
      %80 = sbr.rel (0) target = $region17
    $region16: #{tpu_custom_call.1} parent=1 // pred_region
      %s82 = ssub.s32 128, 128
      %83 = vsyncadd [#allocation3], %s82
      %s85 = sshll.u32 [#allocation2], 4
      %s86 = int_to_ptr.vmem [resolvable:$true] %s85
      %88 = dma.vmem_to_hbm [thread:$0]  %s86, 128, %s3, [#allocation3]
    $region17: #{tpu_custom_call.1} parent=1 // pred_fallthru
      _
    // Predicated region
    $region18: #{tpu_custom_call.1} parent=1 // pred_check
      _
    $region19: #{tpu_custom_call.1} parent=1 // pred_check_branch
      %90 = sbr.rel (0) target = $region21
    $region20: #{tpu_custom_call.1} parent=1 // pred_region
      %91 = dma.done [#allocation3], 128
    $region21: #{tpu_custom_call.1} parent=1 // pred_fallthru
      _
    %92 = vsyncpa [#allocation3], 1

</llo_original>
